<compile_context>
chip_gen: v7x
topology: tpu7x:2x2x1
jax: 0.10.0
libtpu: 0.0.40
codegen_flags: <defaults>
</compile_context>

<pallas_src>
import functools

import numpy as np
import jax
import jax.numpy as jnp
from jax.experimental import pallas as pl
from jax.experimental.pallas import tpu as pltpu


def _round_up(n, m):
    return ((n + m - 1) // m) * m


# ----------------------------------------------------------------------------------
# Pallas kernel: folded block-sparse matmul + bias, output resident per output row
# ----------------------------------------------------------------------------------
def _pooler_kernel(row_ref, first_ref, col_ref, x_ref, v_ref, b_ref, o_ref, *,
                   k_fold, a1p):
    # row_ref/first_ref/col_ref: SMEM scalar-prefetch schedules
    # x_ref: [B, graph_size1*A1p] bf16  (whole padded input, VMEM resident)
    # v_ref: [K_FOLD, A1p, A2p]   bf16  (contiguous schedule-ordered weight blocks)
    # b_ref: [1, A2p]             f32   (bias slice of this chunk's output row)
    # o_ref: [B, A2p]             f32   (resident across all chunks of the row)
    c = pl.program_id(0)

    # First chunk of an output row: initialize the resident accumulator with the bias.
    # Empty rows get one all-zero chunk, so every output block is visited exactly once
    # as "first" and bias-only rows come out correct.
    @pl.when(first_ref[c] == 1)
    def _init():
        o_ref[...] = jnp.broadcast_to(b_ref[...], o_ref.shape)

    # K_FOLD edges folded into this grid step: one large contiguous weight DMA,
    # K_FOLD small MXU passes against the VMEM-resident x.
    acc = jnp.zeros(o_ref.shape, jnp.float32)
    for kk in range(k_fold):                          # static unroll, k_fold <= 8
        col = col_ref[c * k_fold + kk]                # x column block of this edge slot
        start = pl.multiple_of(col * a1p, 128)        # lane-aligned dynamic slice
        xk = x_ref[:, pl.ds(start, a1p)]
        acc = acc + jnp.dot(xk, v_ref[kk], preferred_element_type=jnp.float32)
    o_ref[...] += acc


def _pooler_pallas(row_of_chunk, first_of_chunk, col_of_slot, xp, v_sched, bp, *,
                   n_chunks, k_fold, graph_size1, graph_size2, a1p, a2p):
    B = xp.shape[0]

    # Whole padded x resident in VMEM (constant block index -> single DMA).
    x_spec = pl.BlockSpec((B, graph_size1 * a1p), lambda c, row, first, col: (0, 0))
    # Contiguous K_FOLD weight blocks per chunk (schedule-ordered at __init__).
    v_spec = pl.BlockSpec((k_fold, a1p, a2p),     lambda c, row, first, col: (c, 0, 0))
    # Bias slice of the chunk's output row; re-DMA only when the row changes.
    b_spec = pl.BlockSpec((1, a2p),               lambda c, row, first, col: (0, row[c]))
    # Output block resident across all consecutive chunks of the same row.
    o_spec = pl.BlockSpec((B, a2p),               lambda c, row, first, col: (0, row[c]))

    kernel = functools.partial(_pooler_kernel, k_fold=k_fold, a1p=a1p)

    return pl.pallas_call(
        kernel,
        out_shape=jax.ShapeDtypeStruct((B, graph_size2 * a2p), jnp.float32),
        grid_spec=pltpu.PrefetchScalarGridSpec(
            num_scalar_prefetch=3,
            grid=(n_chunks,),
            in_specs=[x_spec, v_spec, b_spec],
            out_specs=o_spec,
        ),
        # Single flat chunk axis carries both the reduction and the (monotone) output-row
        # change -> must be sequential.  TODO(synk): for v7x megacore, pre-split rows into
        # a leading parallel axis when graph_size2 is large enough.
        compiler_params=pltpu.CompilerParams(
            dimension_semantics=("arbitrary",)),
    )(row_of_chunk, first_of_chunk, col_of_slot, xp, v_sched, bp)


# ----------------------------------------------------------------------------------
# Module wrapper (JAX glue: schedules built once at init, lean per-forward sampling)
# ----------------------------------------------------------------------------------
class BayesianSparsePooler:
    def __init__(self, arr_size1, arr_size2, indices, log_var=0.0, alpha=None, *, key):
        indices = np.asarray(indices, dtype=np.int64)
        if indices.ndim != 2 or indices.shape[0] != 2 or indices.shape[1] == 0:
            raise ValueError("indices must be a [2, n_edges>0] array")

        self.arr_size1 = A1 = int(arr_size1)
        self.arr_size2 = A2 = int(arr_size2)
        self.n_edges = n_edges = int(indices.shape[1])

        self.graph_size1 = int(indices[0].max()) + 1
        self.graph_size2 = int(indices[1].max()) + 1
        self.size1 = self.graph_size1 * A1
        self.size2 = self.graph_size2 * A2
        self.alpha = 1 if alpha is None else alpha

        # Block-level structure: edge e -> output row block indices[1,e],
        # input column block indices[0,e].
        edge_rows = indices[1].astype(np.int64)
        edge_cols = indices[0].astype(np.int64)
        self.edge_rows, self.edge_cols = edge_rows, edge_cols

        # Lane-dense padded per-block tile sizes (no-op when already multiples of 128).
        self.A1p = A1p = _round_up(A1, 128)
        self.A2p = A2p = _round_up(A2, 128)

        # ---- CSR-style folded-edge schedule (built once) --------------------------
        deg = np.bincount(edge_rows, minlength=self.graph_size2)
        max_deg = int(deg.max())
        blk_bytes = A1p * A2p * 2                        # one bf16 weight block
        # Fold up to 8 edges per grid step, capped so the per-step weight tile stays
        # <= ~512 KiB (double-buffered: well inside v7x's 64 MiB VMEM) and never exceeds
        # the max row degree (folding beyond it only adds zero-padding).
        self.k_fold = k_fold = max(1, min(8, (512 * 1024) // blk_bytes, max(1, max_deg)))

        order = np.argsort(edge_rows, kind="stable")     # edges sorted by output row
        rows_sorted = edge_rows[order]
        cols_sorted = edge_cols[order]

        chunks_per_row = np.maximum(1, -(-deg // k_fold))   # ceil(deg/k), >=1 per row
        self.n_chunks = n_chunks = int(chunks_per_row.sum())
        n_slots = n_chunks * k_fold

        row_chunk_start = np.zeros(self.graph_size2, np.int64)
        row_chunk_start[1:] = np.cumsum(chunks_per_row)[:-1]
        row_of_chunk = np.repeat(np.arange(self.graph_size2), chunks_per_row)
        first_of_chunk = np.zeros(n_chunks, np.int32)
        first_of_chunk[row_chunk_start] = 1

        edge_start = np.zeros(self.graph_size2, np.int64)
        edge_start[1:] = np.cumsum(deg)[:-1]
        pos_in_row = np.arange(n_edges) - edge_start[rows_sorted]
        slot_of_sorted = row_chunk_start[rows_sorted] * k_fold + pos_in_row

        col_of_slot = np.zeros(n_slots, np.int64)        # padded slots -> column 0 (zero block)
        col_of_slot[slot_of_sorted] = cols_sorted

        slot_of_edge = np.zeros(n_edges, np.int64)       # original edge -> schedule slot
        slot_of_edge[order] = slot_of_sorted
        self.slot_of_edge = slot_of_edge                 # used by the self-test reference

        self.row_of_chunk = jnp.asarray(row_of_chunk, jnp.int32)
        self.first_of_chunk = jnp.asarray(first_of_chunk, jnp.int32)
        self.col_of_slot = jnp.asarray(col_of_slot, jnp.int32)

        # ---- parameters (torch init: bound = 1 / len(self.indices) = 1/2) ---------
        nnz = n_edges * A1 * A2
        bound = 0.5
        k_w, k_b = jax.random.split(key)
        self.weight_mean = jax.random.uniform(k_w, (nnz,), jnp.float32, -bound, bound)
        self.weight_log_var = jnp.full((nnz,), float(log_var), jnp.float32)
        self.b_mean = jax.random.uniform(k_b, (self.size2,), jnp.float32, -bound, bound)
        self.b_log_var = jnp.full((self.size2,), float(log_var), jnp.float32)

        # Schedule-ordered, lane-padded mean / std built ONCE so forward() never
        # re-pads or re-orders the weight stream.  Padded slots / lane-pad regions
        # have mean = std = 0 and therefore sample to exactly 0.
        mean_blocks = self.weight_mean.reshape(n_edges, A1, A2)
        std_blocks = jnp.exp(self.weight_log_var).reshape(n_edges, A1, A2)
        slot_idx = jnp.asarray(slot_of_edge)
        self.w_mean_sched = (jnp.zeros((n_slots, A1p, A2p), jnp.float32)
                             .at[slot_idx, :A1, :A2].set(mean_blocks))
        self.w_std_sched = (jnp.zeros((n_slots, A1p, A2p), jnp.float32)
                            .at[slot_idx, :A1, :A2].set(std_blocks))

    def sample_scheduled(self, key):
        """Sample stochastic weights / bias; weights are produced directly in the
        kernel's schedule-ordered, lane-padded bf16 layout (one fused elementwise pass)."""
        k_v, k_b = jax.random.split(key)
        noise = jax.random.normal(k_v, self.w_mean_sched.shape, jnp.float32)
        v_sched = (noise * self.w_std_sched + self.w_mean_sched).astype(jnp.bfloat16)
        b = (jax.random.normal(k_b, self.b_mean.shape, jnp.float32)
             * jnp.exp(self.b_log_var) + self.b_mean)
        return v_sched, b

    def forward(self, x, key):
        # x: [B, size1, 1]  (batched dense input to spmm)
        B = x.shape[0]
        A1, A2, A1p, A2p = self.arr_size1, self.arr_size2, self.A1p, self.A2p

        v_sched, b = self.sample_scheduled(key)

        # bf16 input, lane-padded per column block only if needed (skip when aligned).
        # NOTE: operands are bf16 (f32 MXU accumulation); keep x in f32 if fidelity to
        # the PyTorch f32 spmm matters more than HBM bandwidth.
        x2 = x.reshape(B, self.graph_size1, A1).astype(jnp.bfloat16)
        if A1p != A1:
            x2 = jnp.pad(x2, ((0, 0), (0, 0), (0, A1p - A1)))
        xp = x2.reshape(B, self.graph_size1 * A1p)

        # f32 bias, lane-padded per row block only if needed.
        b2 = b.reshape(self.graph_size2, A2)
        if A2p != A2:
            b2 = jnp.pad(b2, ((0, 0), (0, A2p - A2)))
        bp = b2.reshape(1, self.graph_size2 * A2p)

        out_p = _pooler_pallas(self.row_of_chunk, self.first_of_chunk, self.col_of_slot,
                               xp, v_sched, bp,
                               n_chunks=self.n_chunks, k_fold=self.k_fold,
                               graph_size1=self.graph_size1, graph_size2=self.graph_size2,
                               a1p=A1p, a2p=A2p)

        out = out_p.reshape(B, self.graph_size2, A2p)
        if A2p != A2:
            out = out[:, :, :A2]
        out = out.reshape(B, self.size2, 1)
        # The PyTorch forward computes a KL term and then overwrites it with 0.
        kl = jnp.float32(0.0)
        return out, self.alpha * kl


# ----------------------------------------------------------------------------------
# Self-test
# ----------------------------------------------------------------------------------
if __name__ == "__main__":
    root = jax.random.PRNGKey(0)
    B = 2

    configs = [
        # (name, graph indices [2, n_edges], arr_size1, arr_size2)
        ("aligned-128", np.array([[0, 1, 2, 3],
                                  [1, 2, 3, 0]], np.int64), 128, 128),
        # lane padding, an empty output row (row 1), duplicate edges
        ("padded-8",    np.array([[0, 1, 1, 2],
                                  [0, 2, 2, 2]], np.int64), 8, 8),
        # high-degree row -> multiple folded chunks per output row, empty row,
        # duplicate (row, col) pairs, folding K_FOLD > 1
        ("folded-dup",  np.array([[0, 1, 2, 3, 4, 0, 1, 2, 3, 4, 1, 1, 2],
                                  [0, 0, 0, 0, 0, 0, 0, 0, 0, 0, 2, 2, 2]], np.int64), 8, 8),
    ]

    for cfg_id, (name, indices, a1, a2) in enumerate(configs):
        k_params, k_x, k_fwd = jax.random.split(jax.random.fold_in(root, cfg_id), 3)
        model = BayesianSparsePooler(a1, a2, indices, log_var=0.0, alpha=None,
                                     key=k_params)
        x = jax.random.normal(k_x, (B, model.size1, 1), dtype=jnp.float32)

        out, kl = model.forward(x, k_fwd)
        out = jax.block_until_ready(out)
        assert float(kl) == 0.0

        # Reference: same sampled (bf16-rounded) weights / bias, dense W built by
        # block scatter-add, f64 accumulation.
        v_sched, b = model.sample_scheduled(k_fwd)
        v_np = np.asarray(v_sched.astype(jnp.float32)).astype(np.float64)
        xb = np.asarray(x.reshape(B, model.size1).astype(jnp.bfloat16)
                        .astype(jnp.float32)).astype(np.float64)
        A1, A2 = model.arr_size1, model.arr_size2
        W = np.zeros((model.size2, model.size1), np.float64)
        for e in range(model.n_edges):
            r = int(model.edge_rows[e]); c = int(model.edge_cols[e])
            V_e = v_np[int(model.slot_of_edge[e]), :A1, :A2]
            W[r * A2:(r + 1) * A2, c * A1:(c + 1) * A1] += V_e.T
        ref = xb @ W.T + np.asarray(b).astype(np.float64)[None, :]
        ref = ref.reshape(B, model.size2, 1)

        np.testing.assert_allclose(np.asarray(out).astype(np.float64), ref,
                                   rtol=5e-4, atol=5e-4)

    print("KERNEL_OK")
</pallas_src>

<mosaic_0001>
module attributes {stable_mosaic.version = 11 : i64} {
  func.func @_pooler_kernel(%arg0: i32, %arg1: memref<4xi32, #tpu.memory_space<smem>>, %arg2: memref<4xi32, #tpu.memory_space<smem>>, %arg3: memref<4xi32, #tpu.memory_space<smem>>, %arg4: memref<2x512xbf16, #tpu.memory_space<vmem>>, %arg5: memref<1x128x128xbf16, #tpu.memory_space<vmem>>, %arg6: memref<1x128xf32, #tpu.memory_space<vmem>>, %arg7: memref<2x128xf32, #tpu.memory_space<vmem>>) attributes {dimension_semantics = [#tpu.dimension_semantics<arbitrary>], iteration_bounds = array<i64: 4>, scalar_prefetch = 3 : i64, scratch_operands = 0 : i64, tpu.core_type = #tpu.core_type<tc>, window_params = [{pipeline_mode = #tpu.pipeline_mode<synchronous>, transform_indices = @transform_0, window_bounds = array<i64: 2, 512>}, {transform_indices = @transform_1, window_bounds = array<i64: 1, 128, 128>}, {transform_indices = @transform_2, window_bounds = array<i64: 1, 128>}, {transform_indices = @transform_3, window_bounds = array<i64: 2, 128>}]} {
    %0 = arith.index_cast %arg0 : i32 to index
    %1 = memref.load %arg2[%0] : memref<4xi32, #tpu.memory_space<smem>>
    %c1_i32 = arith.constant 1 : i32
    %2 = arith.cmpi eq, %1, %c1_i32 : i32
    %3 = arith.extui %2 : i1 to i32
    %c0_i32 = arith.constant 0 : i32
    %4 = arith.cmpi ne, %3, %c0_i32 : i32
    scf.if %4 {
      %c0_10 = arith.constant 0 : index
      %c0_11 = arith.constant 0 : index
      %21 = vector.load %arg6[%c0_10, %c0_11] : memref<1x128xf32, #tpu.memory_space<vmem>>, vector<1x128xf32>
      %22 = vector.shape_cast %21 : vector<1x128xf32> to vector<1x128xf32>
      %23 = vector.broadcast %22 : vector<1x128xf32> to vector<2x128xf32>
      %c0_12 = arith.constant 0 : index
      %c0_13 = arith.constant 0 : index
      %24 = vector.load %arg7[%c0_12, %c0_13] : memref<2x128xf32, #tpu.memory_space<vmem>>, vector<2x128xf32>
      tpu.vector_store %arg7[%c0_12, %c0_13], %23 {strides = array<i32>} : memref<2x128xf32, #tpu.memory_space<vmem>>, vector<2x128xf32>,
    } else {
    }
    %cst = arith.constant 0.000000e+00 : f32
    %5 = vector.broadcast %cst : f32 to vector<2x128xf32>
    %c1_i32_0 = arith.constant 1 : i32
    %6 = arith.muli %arg0, %c1_i32_0 : i32
    %c0_i32_1 = arith.constant 0 : i32
    %7 = arith.addi %6, %c0_i32_1 : i32
    %8 = arith.index_cast %7 : i32 to index
    %9 = memref.load %arg3[%8] : memref<4xi32, #tpu.memory_space<smem>>
    %c128_i32 = arith.constant 128 : i32
    %10 = arith.muli %9, %c128_i32 : i32
    %11 = tpu.assume_multiple %10, 128 : i32
    %c0 = arith.constant 0 : index
    %12 = arith.index_cast %11 : i32 to index
    %13 = vector.load %arg4[%c0, %12] : memref<2x512xbf16, #tpu.memory_space<vmem>>, vector<2x128xbf16>
    %c0_2 = arith.constant 0 : index
    %c0_3 = arith.constant 0 : index
    %c0_4 = arith.constant 0 : index
    %14 = vector.load %arg5[%c0_2, %c0_3, %c0_4] : memref<1x128x128xbf16, #tpu.memory_space<vmem>>, vector<1x128x128xbf16>
    %15 = vector.shape_cast %14 : vector<1x128x128xbf16> to vector<128x128xbf16>
    %cst_5 = arith.constant dense<0.000000e+00> : vector<2x128xf32>
    %16 = tpu.matmul %13, %15, %cst_5 {dimension_numbers = #tpu.dot_dimension_numbers<[1], [0], [0], [1], [0, 0, 1, 1], [], []>} : vector<2x128xbf16>, vector<128x128xbf16>, vector<2x128xf32> -> vector<2x128xf32>
    %17 = arith.addf %5, %16 : vector<2x128xf32>
    %c0_6 = arith.constant 0 : index
    %c0_7 = arith.constant 0 : index
    %18 = vector.load %arg7[%c0_6, %c0_7] : memref<2x128xf32, #tpu.memory_space<vmem>>, vector<2x128xf32>
    %19 = arith.addf %18, %17 : vector<2x128xf32>
    %c0_8 = arith.constant 0 : index
    %c0_9 = arith.constant 0 : index
    %20 = vector.load %arg7[%c0_8, %c0_9] : memref<2x128xf32, #tpu.memory_space<vmem>>, vector<2x128xf32>
    tpu.vector_store %arg7[%c0_8, %c0_9], %19 {strides = array<i32>} : memref<2x128xf32, #tpu.memory_space<vmem>>, vector<2x128xf32>,
    return
  }
  func.func @transform_0(%arg0: i32, %arg1: memref<4xi32, #tpu.memory_space<smem>>, %arg2: memref<4xi32, #tpu.memory_space<smem>>, %arg3: memref<4xi32, #tpu.memory_space<smem>>) -> (i32, i32) {
    %c0_i32 = arith.constant 0 : i32
    %c0_i32_0 = arith.constant 0 : i32
    %c0_i32_1 = arith.constant 0 : i32
    return %c0_i32, %c0_i32_0 : i32, i32
  }
  func.func @transform_1(%arg0: i32, %arg1: memref<4xi32, #tpu.memory_space<smem>>, %arg2: memref<4xi32, #tpu.memory_space<smem>>, %arg3: memref<4xi32, #tpu.memory_space<smem>>) -> (i32, i32, i32) {
    %c0_i32 = arith.constant 0 : i32
    %c0_i32_0 = arith.constant 0 : i32
    %c0_i32_1 = arith.constant 0 : i32
    return %arg0, %c0_i32, %c0_i32_0 : i32, i32, i32
  }
  func.func @transform_2(%arg0: i32, %arg1: memref<4xi32, #tpu.memory_space<smem>>, %arg2: memref<4xi32, #tpu.memory_space<smem>>, %arg3: memref<4xi32, #tpu.memory_space<smem>>) -> (i32, i32) {
    %0 = arith.index_cast %arg0 : i32 to index
    %1 = memref.load %arg1[%0] : memref<4xi32, #tpu.memory_space<smem>>
    %c0_i32 = arith.constant 0 : i32
    %c0_i32_0 = arith.constant 0 : i32
    return %c0_i32, %1 : i32, i32
  }
  func.func @transform_3(%arg0: i32, %arg1: memref<4xi32, #tpu.memory_space<smem>>, %arg2: memref<4xi32, #tpu.memory_space<smem>>, %arg3: memref<4xi32, #tpu.memory_space<smem>>) -> (i32, i32) {
    %0 = arith.index_cast %arg0 : i32 to index
    %1 = memref.load %arg1[%0] : memref<4xi32, #tpu.memory_space<smem>>
    %c0_i32 = arith.constant 0 : i32
    %c0_i32_0 = arith.constant 0 : i32
    return %c0_i32, %1 : i32, i32
  }
}

</mosaic_0001>

<llo_original>
// kernel: tpu_custom_call.1
$region0: #{tpu_custom_call.1}
  #allocation0 [shape = 'u32[]', space=smem, size = 0x4, offset = 0x4, fixed_abs, tag = 'smem constant byte address 0x4 - core index']
  #allocation1 [shape = 'u32[144,128]{1,0:T(1,128)}', space=vmem, size = 0x12000, scoped, tag = 'internal scratch']
  #allocation2 [shape = 's32[1]{0}', space=sflag, size = 0x4, scoped, tag = 'scoped memory for tpu_custom_call.1']
  #allocation3 [shape = 'u8[512]{0}', space=smem, size = 0x200, scoped, tag = 'prefetched SMEM operand 0']
  #allocation4 [shape = 'u8[512]{0}', space=smem, size = 0x200, scoped, tag = 'prefetched SMEM operand 1']
  #allocation5 [shape = 'u8[512]{0}', space=smem, size = 0x200, scoped, tag = 'prefetched SMEM operand 2']
  %s0 = inlined_call_operand.hbm [shape: s32[4], index: 0, kind: input, shape index: {}]
  %s1 = inlined_call_operand.vmem [shape: s32[4], index: 1, kind: input, shape index: {}]
  %s2 = inlined_call_operand.vmem [shape: s32[4], index: 2, kind: input, shape index: {}]
  %s3 = inlined_call_operand.vmem [shape: bf16[2,512], index: 3, kind: input, shape index: {}]
  %s4 = inlined_call_operand.hbm [shape: bf16[4,128,128], index: 4, kind: input, shape index: {}]
  %s5 = inlined_call_operand.vmem [shape: f32[1,512], index: 5, kind: input, shape index: {}]
  %s6 = inlined_call_operand.hbm [shape: f32[2,512], index: 6, kind: output, shape index: {}]
  %s7 = sld [smem:[#allocation0]]
  $region53: #{tpu_custom_call.1} parent=0
    _
  %s9 = ssub.s32 1, %s7
  %s10 = scalar_select 0, %s9, %s7
  %12 = dma.hbm_to_smem %s0, 16, [#allocation3], [#allocation2]
  %s13 = sshll.u32 %s1, 4
  %s14 = int_to_ptr.vmem [resolvable:$true] %s13
  %16 = dma.vmem_to_smem %s14, 16, [#allocation4], [#allocation2]
  %s17 = sshll.u32 %s2, 4
  %s18 = int_to_ptr.vmem [resolvable:$true] %s17
  %20 = dma.vmem_to_smem %s18, 16, [#allocation5], [#allocation2]
  %21 = dma.done [#allocation2], 48
  %22 = sfence
  $region1: #{tpu_custom_call.1} parent=0
    #allocation6 [shape = 'u8[65536]{0}', space=vmem, size = 0x10000, scoped, tag = 'input window, operand 4']
    #allocation7 [shape = 's32[2]{0}', space=sflag, size = 0x8, scoped, tag = 'scoped memory for tpu_custom_call.1']
    #allocation8 [shape = 's32[2]{0}', space=sflag, size = 0x8, scoped, tag = 'scoped memory for tpu_custom_call.1']
    #allocation9 [shape = 'u8[2048]{0}', space=vmem, size = 0x800, scoped, tag = 'output window, operand 0']
    %23 = vsyncpa [#allocation7], 0
    %s24 = scalar_lea.sflag [#allocation7], 1
    %25 = vsyncpa %s24, 0
    %26 = vsyncpa [#allocation8], 0
    %s27 = scalar_lea.sflag [#allocation8], 1
    %28 = vsyncpa %s27, 0
    loop: start=0, step=1, limit=6
    $region2: #{tpu_custom_call.1} parent=1 // loop_pre_header
      _
    $region3: #{tpu_custom_call.1} parent=1 // loop_header
      %s30 = sphi 0, %s34
      %p31 = scmp.ge.s32.totalorder %s30, 6
      %s38 = sphi 0, %s38
      %s40 = sphi 0, %s38
      %s41 = sphi 0, %s40
      %s55 = sphi 0, %s41
      %s61 = sphi 0, %s63
      %s64 = sphi 0, %s61
      %s65 = sphi 0, %s64
      %s81 = sphi 0, %s65
      %s89 = sphi 0, %s91
      %s92 = sphi 0, %s89
      %s93 = sphi 0, %s92
      %s109 = sphi 0, %s93
      %s117 = sphi 0, %s119
      %s120 = sphi 0, %s117
      %s121 = sphi 0, %s120
      %s137 = sphi 0, %s121
    $region4: #{tpu_custom_call.1} parent=1 // loop_header_branch
      %33 = sbr.rel (%p31) target = $region8
    $region5: #{tpu_custom_call.1} parent=1 // loop_body
      %s35 = ssub.s32 %s30, 1
      %s36 = ssub.s32 %s30, 2
      %s37 = sadd.s32 %s30, 1
      %s39 = sadd.s32 %s38, 1
      %p42 = scmp.eq.s32.totalorder %s30, 3
      %p43 = scmp.ne.s32.totalorder %s38, %s40
      %p44 = scmp.eq.s32.totalorder %s30, 0
      %p45 = por %p43, %p44
      %p46 = scmp.ne.s32.totalorder %s38, %s40
      %p47 = scmp.eq.s32.totalorder %s35, 3
      %p48 = por %p46, %p47
      %p49 = scmp.ne.s32.totalorder %s40, %s41
      %p50 = scmp.eq.s32.totalorder %s35, 0
      %p51 = por %p49, %p50
      %p52 = scmp.ne.s32.totalorder %s40, %s41
      %p53 = scmp.eq.s32.totalorder %s36, 3
      %p54 = por %p52, %p53
      %p56 = scmp.ne.s32.totalorder %s41, %s55
      %p57 = scmp.eq.s32.totalorder %s36, 0
      %p58 = por %p56, %p57
      %s59 = ssub.s32 %s30, %s37
      %p60 = scmp.eq.s32.totalorder %s59, 0
      %s62 = sadd.s32 %s61, 1
      %s63 = scalar_select %p60, %s61, %s62
      %p66 = pneg %p60
      %p67 = scmp.eq.s32.totalorder %s30, 3
      %p68 = por %p66, %p67
      %p69 = scmp.ne.s32.totalorder %s61, %s64
      %p70 = scmp.eq.s32.totalorder %s30, 0
      %p71 = por %p69, %p70
      %p72 = scmp.ne.s32.totalorder %s61, %s64
      %p73 = scmp.eq.s32.totalorder %s35, 3
      %p74 = por %p72, %p73
      %p75 = scmp.ne.s32.totalorder %s64, %s65
      %p76 = scmp.eq.s32.totalorder %s35, 0
      %p77 = por %p75, %p76
      %p78 = scmp.ne.s32.totalorder %s64, %s65
      %p79 = scmp.eq.s32.totalorder %s36, 3
      %p80 = por %p78, %p79
      %p82 = scmp.ne.s32.totalorder %s65, %s81
      %p83 = scmp.eq.s32.totalorder %s36, 0
      %p84 = por %p82, %p83
      %s85 = sld [smem:[#allocation3 + %s30]]
      %s86 = sld [smem:[#allocation3 + %s37]]
      %s87 = ssub.s32 %s85, %s86
      %p88 = scmp.eq.s32.totalorder %s87, 0
      %s90 = sadd.s32 %s89, 1
      %s91 = scalar_select %p88, %s89, %s90
      %p94 = pneg %p88
      %p95 = scmp.eq.s32.totalorder %s30, 3
      %p96 = por %p94, %p95
      %p97 = scmp.ne.s32.totalorder %s89, %s92
      %p98 = scmp.eq.s32.totalorder %s30, 0
      %p99 = por %p97, %p98
      %p100 = scmp.ne.s32.totalorder %s89, %s92
      %p101 = scmp.eq.s32.totalorder %s35, 3
      %p102 = por %p100, %p101
      %p103 = scmp.ne.s32.totalorder %s92, %s93
      %p104 = scmp.eq.s32.totalorder %s35, 0
      %p105 = por %p103, %p104
      %p106 = scmp.ne.s32.totalorder %s92, %s93
      %p107 = scmp.eq.s32.totalorder %s36, 3
      %p108 = por %p106, %p107
      %p110 = scmp.ne.s32.totalorder %s93, %s109
      %p111 = scmp.eq.s32.totalorder %s36, 0
      %p112 = por %p110, %p111
      %s113 = sld [smem:[#allocation3 + %s30]]
      %s114 = sld [smem:[#allocation3 + %s37]]
      %s115 = ssub.s32 %s113, %s114
      %p116 = scmp.eq.s32.totalorder %s115, 0
      %s118 = sadd.s32 %s117, 1
      %s119 = scalar_select %p116, %s117, %s118
      %p122 = pneg %p116
      %p123 = scmp.eq.s32.totalorder %s30, 3
      %p124 = por %p122, %p123
      %p125 = scmp.ne.s32.totalorder %s117, %s120
      %p126 = scmp.eq.s32.totalorder %s30, 0
      %p127 = por %p125, %p126
      %p128 = scmp.ne.s32.totalorder %s117, %s120
      %p129 = scmp.eq.s32.totalorder %s35, 3
      %p130 = por %p128, %p129
      %p131 = scmp.ne.s32.totalorder %s120, %s121
      %p132 = scmp.eq.s32.totalorder %s35, 0
      %p133 = por %p131, %p132
      %p134 = scmp.ne.s32.totalorder %s120, %s121
      %p135 = scmp.eq.s32.totalorder %s36, 3
      %p136 = por %p134, %p135
      %p138 = scmp.ne.s32.totalorder %s121, %s137
      %p139 = scmp.eq.s32.totalorder %s36, 0
      %p140 = por %p138, %p139
      %p141 = scmp.le.s32.totalorder 1, %s30
      %p142 = scmp.lt.s32.totalorder %s30, 5
      %p143 = pnand %p141, %p142
      %p144 = pneg %p143
      // Predicated region
      $region9: #{tpu_custom_call.1} parent=5 // pred_check
        _
      $region10: #{tpu_custom_call.1} parent=5 // pred_check_branch
        %146 = sbr.rel (%p143) target = $region12
      $region11: #{tpu_custom_call.1} parent=5 // pred_region
        %s147 = ssub.s32 %s30, 1
        // Predicated region
        $region13: #{tpu_custom_call.1} parent=11 // pred_check
          %p148 = pneg %p51
        $region14: #{tpu_custom_call.1} parent=11 // pred_check_branch
          %150 = sbr.rel (%p148) target = $region16
        $region15: #{tpu_custom_call.1} parent=11 // pred_region
          _
        $region16: #{tpu_custom_call.1} parent=11 // pred_fallthru
          _
      $region12: #{tpu_custom_call.1} parent=5 // pred_fallthru
        _
      %p151 = scmp.lt.s32.totalorder %s30, 4
      // Predicated region
      $region17: #{tpu_custom_call.1} parent=5 // pred_check
        %p152 = pneg %p151
      $region18: #{tpu_custom_call.1} parent=5 // pred_check_branch
        %154 = sbr.rel (%p152) target = $region20
      $region19: #{tpu_custom_call.1} parent=5 // pred_region
        // Predicated region
        $region21: #{tpu_custom_call.1} parent=19 // pred_check
          %p155 = pneg %p71
        $region22: #{tpu_custom_call.1} parent=19 // pred_check_branch
          %157 = sbr.rel (%p155) target = $region24
        $region23: #{tpu_custom_call.1} parent=19 // pred_region
          %s158 = sand.u32 %s61, 1
          %s159 = scalar_lea.sflag [#allocation7], %s158
          %s160 = sand.u32 %s61, 1
          %s161 = smul.addr %s160, 64
          %s162 = scalar_lea.vmem [#allocation6], %s161
          %s164 = ssub.s32 1024, 1024
          %165 = vsyncadd %s159, %s164
          %s166 = smul.addr %s30, 16
          %s167 = smul.addr %s166, 64
          %s168 = scalar_lea.hbm %s4, %s167
          %s169 = sshll.u32 %s162, 4
          %s170 = int_to_ptr.vmem [resolvable:$true] %s169
          %175 = dma.hbm_to_vmem [thread:$0]  %s168, 1024, %s170, %s159, 64, 64, 4
        $region24: #{tpu_custom_call.1} parent=19 // pred_fallthru
          _
        // Predicated region
        $region25: #{tpu_custom_call.1} parent=19 // pred_check
          %p176 = pneg %p99
        $region26: #{tpu_custom_call.1} parent=19 // pred_check_branch
          %178 = sbr.rel (%p176) target = $region28
        $region27: #{tpu_custom_call.1} parent=19 // pred_region
          %s179 = sld [smem:[#allocation3 + %s30]]
          %p180 = scmp.lt.s32.totalorder %s179, 3
          %s181 = scalar_select %p180, %s179, 3
          %s182 = scalar_lea.vmem %s5, %s181
          %s183 = sld [smem:[#allocation3 + %s30]]
        $region28: #{tpu_custom_call.1} parent=19 // pred_fallthru
          _
      $region20: #{tpu_custom_call.1} parent=5 // pred_fallthru
        _
      %p184 = scmp.le.s32.totalorder 1, %s30
      %p185 = scmp.lt.s32.totalorder %s30, 5
      %p186 = pnand %p184, %p185
      %p187 = pneg %p186
      // Predicated region
      $region29: #{tpu_custom_call.1} parent=5 // pred_check
        _
      $region30: #{tpu_custom_call.1} parent=5 // pred_check_branch
        %189 = sbr.rel (%p186) target = $region32
      $region31: #{tpu_custom_call.1} parent=5 // pred_region
        %s190 = ssub.s32 %s30, 1
        %s191 = sand.u32 %s64, 1
        %s192 = scalar_lea.sflag [#allocation7], %s191
        %s193 = sand.u32 %s64, 1
        %s194 = smul.addr %s193, 64
        %s195 = scalar_lea.vmem [#allocation6], %s194
        // Predicated region
        $region33: #{tpu_custom_call.1} parent=31 // pred_check
          %p196 = pneg %p77
        $region34: #{tpu_custom_call.1} parent=31 // pred_check_branch
          %198 = sbr.rel (%p196) target = $region36
        $region35: #{tpu_custom_call.1} parent=31 // pred_region
          %199 = dma.done %s192, 1024
        $region36: #{tpu_custom_call.1} parent=31 // pred_fallthru
          _
        %p200 = pneg %p51
        %p201 = pneg %p48
        %s202 = sand.u32 %s64, 1
        %s203 = scalar_lea.sflag [#allocation7], %s202
        %s204 = sand.u32 %s64, 1
        %s205 = smul.addr %s204, 64
        %s206 = scalar_lea.vmem [#allocation6], %s205
        %p207 = pneg %p77
        %p208 = pneg %p74
        %s209 = sld [smem:[#allocation3 + %s35]]
        %p210 = scmp.lt.s32.totalorder %s209, 3
        %s211 = scalar_select %p210, %s209, 3
        %s212 = scalar_lea.vmem %s5, %s211
        %p213 = pneg %p105
        %p214 = pneg %p102
        %p215 = pneg %p133
        %p216 = pneg %p130
        %s217 = sand.u32 %s120, 1
        %s218 = scalar_lea.sflag [#allocation8], %s217
        %s219 = sand.u32 %s120, 1
        %s220 = smul.addr %s219, 2
        %s221 = scalar_lea.vmem [#allocation9], %s220
        %s222 = sld [smem:[#allocation3 + %s35]]
        %p223 = scmp.lt.s32.totalorder %s222, 3
        %s224 = scalar_select %p223, %s222, 3
        %s225 = scalar_lea.vmem %s5, %s224
        %s226 = sld [smem:[#allocation3 + %s35]]
        %s227 = sld [smem:[#allocation3 + %s35]]
        %s229 = sld [smem:[#allocation4 + %s35]]
        %p230 = scmp.eq.s32.totalorder %s229, 1
        // Predicated region
        $region37: #{tpu_custom_call.1} parent=31 // pred_check
          %p231 = pneg %p230
        $region38: #{tpu_custom_call.1} parent=31 // pred_check_branch
          %233 = sbr.rel (%p231) target = $region40
        $region39: #{tpu_custom_call.1} parent=31 // pred_region
          %v234 = vld [vmem:[%s225] sm:$0x1]
          %v236 = vlaneseq
          %v237 = vshrl.u32 %v236, 7
          %v238 = vsub.s32 0, %v237
          %v239 = vrot.slane %v234, %v238
          %241 = vst [vmem:[%s221] sm:$0x3] %v239
        $region40: #{tpu_custom_call.1} parent=31 // pred_fallthru
          _
        %s242 = sld [smem:[#allocation5 + %s35]]
        %s243 = smul.u32 %s242, 128
        %s244 = sshra.s32 %s243, 7
        %s245 = sand.u32 %s243, 127
        %s246 = scalar_lea.vmem %s3, %s244
        %v247 = vld [vmem:[%s246] sm:$0x1]
        %v248 = vld [vmem:[%s195] sm:$0xf]
        %v249 = vld [vmem:[%s195 + $0x4] sm:$0xf]
        %v250 = vld [vmem:[%s195 + $0x8] sm:$0xf]
        %v251 = vld [vmem:[%s195 + $0xc] sm:$0xf]
        %v252 = vld [vmem:[%s195 + $0x10] sm:$0xf]
        %v253 = vld [vmem:[%s195 + $0x14] sm:$0xf]
        %v254 = vld [vmem:[%s195 + $0x18] sm:$0xf]
        %v255 = vld [vmem:[%s195 + $0x1c] sm:$0xf]
        %v256 = vld [vmem:[%s195 + $0x20] sm:$0xf]
        %v257 = vld [vmem:[%s195 + $0x24] sm:$0xf]
        %v258 = vld [vmem:[%s195 + $0x28] sm:$0xf]
        %v259 = vld [vmem:[%s195 + $0x2c] sm:$0xf]
        %v260 = vld [vmem:[%s195 + $0x30] sm:$0xf]
        %v261 = vld [vmem:[%s195 + $0x34] sm:$0xf]
        %v262 = vld [vmem:[%s195 + $0x38] sm:$0xf]
        %v263 = vld [vmem:[%s195 + $0x3c] sm:$0xf]
        %v280 = vunpack.c.l.b16 %v248
        %v281 = vunpack.c.l.b16 %v249
        %v282 = vunpack.c.l.b16 %v250
        %v283 = vunpack.c.l.b16 %v251
        %v284 = vunpack.c.l.b16 %v252
        %v285 = vunpack.c.l.b16 %v253
        %v286 = vunpack.c.l.b16 %v254
        %v287 = vunpack.c.l.b16 %v255
        %v288 = vunpack.c.l.b16 %v256
        %v289 = vunpack.c.l.b16 %v257
        %v290 = vunpack.c.l.b16 %v258
        %v291 = vunpack.c.l.b16 %v259
        %v292 = vunpack.c.l.b16 %v260
        %v293 = vunpack.c.l.b16 %v261
        %v294 = vunpack.c.l.b16 %v262
        %v295 = vunpack.c.l.b16 %v263
        %v296 = vpack.c.b16 %v281, %v280
        %v297 = vpack.c.b16 %v283, %v282
        %v298 = vpack.c.b16 %v285, %v284
        %v299 = vpack.c.b16 %v287, %v286
        %v300 = vpack.c.b16 %v289, %v288
        %v301 = vpack.c.b16 %v291, %v290
        %v302 = vpack.c.b16 %v293, %v292
        %v303 = vpack.c.b16 %v295, %v294
        %312 = vmatprep.subr.bf16.mxu0 0
        %313 = vmatpush1.bf16.msra.mxu0 %v296
        %314 = vmatprep.subr.bf16.mxu0 0
        %315 = vmatpush1.bf16.msra.mxu0 %v297
        %316 = vmatprep.subr.bf16.mxu0 0
        %317 = vmatpush1.bf16.msra.mxu0 %v298
        %318 = vmatprep.subr.bf16.mxu0 0
        %319 = vmatpush1.bf16.msra.mxu0 %v299
        %320 = vmatprep.subr.bf16.mxu0 0
        %321 = vmatpush1.bf16.msra.mxu0 %v300
        %322 = vmatprep.subr.bf16.mxu0 0
        %323 = vmatpush1.bf16.msra.mxu0 %v301
        %324 = vmatprep.subr.bf16.mxu0 0
        %325 = vmatpush1.bf16.msra.mxu0 %v302
        %326 = vmatprep.subr.bf16.mxu0 0
        %327 = vmatpush1.bf16.msra.mxu0 %v303
        %328 = vmatprep.subr.bf16.mxu0 0
        %329 = vmatpush1.bf16.msra.mxu0 0
        %330 = vmatprep.subr.bf16.mxu0 0
        %331 = vmatpush1.bf16.msra.mxu0 0
        %332 = vmatprep.subr.bf16.mxu0 0
        %333 = vmatpush1.bf16.msra.mxu0 0
        %334 = vmatprep.subr.bf16.mxu0 0
        %335 = vmatpush1.bf16.msra.mxu0 0
        %336 = vmatprep.subr.bf16.mxu0 0
        %337 = vmatpush1.bf16.msra.mxu0 0
        %338 = vmatprep.subr.bf16.mxu0 0
        %339 = vmatpush1.bf16.msra.mxu0 0
        %340 = vmatprep.subr.bf16.mxu0 0
        %341 = vmatpush1.bf16.msra.mxu0 0
        %342 = vmatprep.subr.bf16.mxu0 0
        %343 = vmatpush1.bf16.msra.mxu0 0
        %344 = vmatprep.mubr.bf16.mxu0 0
        %345 = vmatmul.mubr.bf16.gmra.mrb[0].mxu0 %v247
        %v346 = vpop.f32.mrb[0].mxu0
        %v347 = vadd.f32 0.0, %v346
        %v348 = vpop.f32.mrb[0].mxu0
        %v349 = vpop.f32.mrb[0].mxu0
        %v350 = vpop.f32.mrb[0].mxu0
        %351 = vdwg.mxu0
        %v352 = vld [vmem:[%s221] sm:$0x3]
        %v353 = vadd.f32 %v352, %v347
        %354 = vst [vmem:[%s221] sm:$0x3] %v353
        %s355 = sand.u32 %s120, 1
        %s356 = scalar_lea.sflag [#allocation8], %s355
        %s357 = sand.u32 %s120, 1
        %s358 = smul.addr %s357, 2
        %s359 = scalar_lea.vmem [#allocation9], %s358
        // Predicated region
        $region41: #{tpu_custom_call.1} parent=31 // pred_check
          %p360 = pneg %p130
        $region42: #{tpu_custom_call.1} parent=31 // pred_check_branch
          %362 = sbr.rel (%p360) target = $region44
        $region43: #{tpu_custom_call.1} parent=31 // pred_region
          %s363 = sld [smem:[#allocation3 + %s35]]
          %s365 = ssub.s32 32, 32
          %366 = vsyncadd %s356, %s365
          %s367 = smul.addr %s363, 32
          %s368 = scalar_lea.hbm %s6, %s367
          %s370 = sshll.u32 %s359, 4
          %s371 = int_to_ptr.vmem [resolvable:$true] %s370
          %373 = dma.vmem_to_hbm [thread:$0]  %s371, 32, %s368, %s356
        $region44: #{tpu_custom_call.1} parent=31 // pred_fallthru
          _
      $region32: #{tpu_custom_call.1} parent=5 // pred_fallthru
        _
      %p374 = scmp.le.s32.totalorder 2, %s30
      // Predicated region
      $region45: #{tpu_custom_call.1} parent=5 // pred_check
        %p375 = pneg %p374
      $region46: #{tpu_custom_call.1} parent=5 // pred_check_branch
        %377 = sbr.rel (%p375) target = $region48
      $region47: #{tpu_custom_call.1} parent=5 // pred_region
        %s378 = ssub.s32 %s30, 2
        // Predicated region
        $region49: #{tpu_custom_call.1} parent=47 // pred_check
          %p379 = pneg %p136
        $region50: #{tpu_custom_call.1} parent=47 // pred_check_branch
          %381 = sbr.rel (%p379) target = $region52
        $region51: #{tpu_custom_call.1} parent=47 // pred_region
          %s382 = sand.u32 %s121, 1
          %s383 = scalar_lea.sflag [#allocation8], %s382
          %s384 = sand.u32 %s121, 1
          %s385 = smul.addr %s384, 2
          %s386 = scalar_lea.vmem [#allocation9], %s385
          %387 = dma.done %s383, 32
        $region52: #{tpu_custom_call.1} parent=47 // pred_fallthru
          _
      $region48: #{tpu_custom_call.1} parent=5 // pred_fallthru
        _
    $region6: #{tpu_custom_call.1} parent=1 // loop_footer
      %s34 = sadd.s32 1, %s30
    $region7: #{tpu_custom_call.1} parent=1 // loop_footer_branch
      %29 = sbr.rel target = $region3
    $region8: #{tpu_custom_call.1} parent=1 // loop_exit
      _
    %388 = vsyncpa [#allocation7], 1
    %s389 = scalar_lea.sflag [#allocation7], 1
    %390 = vsyncpa %s389, 1
    %391 = vsyncpa [#allocation8], 1
    %s392 = scalar_lea.sflag [#allocation8], 1
    %393 = vsyncpa %s392, 1

</llo_original>
